<compile_context>
chip_gen: v5e
topology: v5e:2x2
jax: 0.10.0
libtpu: 0.0.40
codegen_flags: <defaults>
</compile_context>

<pallas_src>
import math

import jax
import jax.numpy as jnp
from jax.experimental import pallas as pl
from jax.experimental.pallas import tpu as pltpu

_MIN_PALLAS_BYTES = 1 << 20  # below this, a fused XLA cast+mul wins


def _round_up(x, m):
    return -(-x // m) * m


def _vmem_working_set_bytes():
    """Double-buffered (in + out) tile budget, derived per TPU generation."""
    cap = 64 * 1024 * 1024  # conservative fallback (v7x per-core VMEM)
    try:
        info = pltpu.get_tpu_info()
        cap = int(getattr(info, "vmem_capacity_bytes", cap)) or cap
    except Exception:
        pass
    # 128 MiB VMEM (v5e/v6e) -> 16 MiB working set, 64 MiB (v7x) -> 8 MiB.
    return max(4 * 1024 * 1024, min(cap // 8, 24 * 1024 * 1024))


def _block_bytes(block, itemsize):
    """Approximate VMEM bytes of one block, with TPU sublane/lane padding."""
    lead = math.prod(block[:-2]) if len(block) > 2 else 1
    sub = _round_up(block[-2], max(1, 32 // itemsize))  # u8 packs 32 sublanes
    lane = _round_up(block[-1], 128)
    return lead * sub * lane * itemsize


def _choose_block(shape, in_itemsize, out_itemsize, ws_bytes):
    """Pick a trailing-slab block shape for an elementwise HBM-bound kernel."""
    nd = len(shape)

    def cost(blk):  # double-buffered input + output tiles
        return 2 * (_block_bytes(blk, in_itemsize) + _block_bytes(blk, out_itemsize))

    block = [1] * nd
    block[-1] = shape[-1]
    block[-2] = min(shape[-2], 32)
    if cost(block) > ws_bytes:
        return None  # pathologically wide trailing dims; caller falls back to XLA

    # Grow trailing dims to full extent while the VMEM budget allows.
    pivot = None
    for d in range(nd - 2, -1, -1):
        trial = list(block)
        trial[d] = shape[d]
        if cost(trial) <= ws_bytes:
            block[d] = shape[d]
        else:
            pivot = d
            break

    if pivot is not None:
        # Tile the first dim that did not fit (multiple of 32 on the sublane dim
        # so both u8 inputs and f32 outputs keep legal packing).
        step = 32 if pivot == nd - 2 else 1
        unit = list(block)
        unit[pivot] = step
        block[pivot] = min(shape[pivot],
                           max(step, (ws_bytes // cost(unit)) * step))
    elif shape[-2] >= 64:
        # Whole image fits one block: still split the sublane dim so there are
        # >= 2 grid steps (v7x megacore sharding + load/store DMA overlap).
        block[-2] = min(shape[-2], _round_up(-(-shape[-2] // 2), 32))

    return tuple(block)


def _make_convert_kernel(scale, out_dtype):
    """Elementwise convert-and-scale kernel; `scale` is a python float or None."""

    def kernel(x_ref, o_ref):
        x = x_ref[...]
        if scale is None:
            o_ref[...] = x.astype(out_dtype)
        else:
            # int -> float: cast to f32, scale by 1/max_int, cast to target.
            o_ref[...] = (x.astype(jnp.float32) * jnp.float32(scale)).astype(out_dtype)

    return kernel


def _xla_convert(image, scale, out_dtype):
    if scale is None:
        return image.astype(out_dtype)
    return (image.astype(jnp.float32) * jnp.float32(scale)).astype(out_dtype)


def convert_image_dtype(image: jax.Array, dtype=jnp.float32, *,
                        force_pallas: bool = False) -> jax.Array:
    """Pallas implementation of torchvision.transforms.functional.convert_image_dtype."""
    in_dtype = jnp.dtype(image.dtype)
    out_dtype = jnp.dtype(dtype)

    if in_dtype == out_dtype:
        return image

    if in_dtype == jnp.dtype(jnp.bool_):
        if not jnp.issubdtype(out_dtype, jnp.floating):
            raise NotImplementedError(f"convert_image_dtype {in_dtype} -> {out_dtype}")
        # bool -> float is a plain 0/1 cast; tiny and scale-free, let XLA fuse it.
        return image.astype(out_dtype)

    if jnp.issubdtype(in_dtype, jnp.integer) and jnp.issubdtype(out_dtype, jnp.floating):
        scale = 1.0 / float(jnp.iinfo(in_dtype).max)
    elif jnp.issubdtype(in_dtype, jnp.floating) and jnp.issubdtype(out_dtype, jnp.floating):
        scale = None
    else:
        # TODO(synk): float->int and int->int image dtype conversions are not
        # needed by the segmentation prepare path; not implemented here.
        raise NotImplementedError(f"convert_image_dtype {in_dtype} -> {out_dtype}")

    shape = image.shape
    n_elems = math.prod(shape)
    in_itemsize = in_dtype.itemsize
    out_itemsize = out_dtype.itemsize
    total_bytes = n_elems * (in_itemsize + out_itemsize)

    if (n_elems == 0 or image.ndim < 2
            or (not force_pallas and total_bytes < _MIN_PALLAS_BYTES)):
        # Tiny / degenerate inputs: one fused XLA elementwise op beats a
        # pallas_call launch plus pipeline prologue/epilogue.
        return _xla_convert(image, scale, out_dtype)

    ws = _vmem_working_set_bytes()
    block = _choose_block(shape, in_itemsize, out_itemsize, ws)
    if block is None:
        # TODO(synk): trailing dims so wide that a 32-row stripe exceeds the VMEM
        # budget; fall back to XLA rather than lane-tiling inside the kernel.
        return _xla_convert(image, scale, out_dtype)

    grid = tuple(pl.cdiv(s, b) for s, b in zip(shape, block))
    index_map = lambda *idx: idx  # identity: block index == grid index per dim
    kernel = _make_convert_kernel(scale, out_dtype)
    vmem_limit = min(2 * ws + 4 * 1024 * 1024, 48 * 1024 * 1024)

    return pl.pallas_call(
        kernel,
        out_shape=jax.ShapeDtypeStruct(shape, out_dtype),
        grid=grid,
        in_specs=[pl.BlockSpec(block, index_map)],
        out_specs=pl.BlockSpec(block, index_map),
        compiler_params=pltpu.CompilerParams(
            dimension_semantics=("parallel",) * len(grid),
            vmem_limit_bytes=vmem_limit,
        ),
        cost_estimate=pl.CostEstimate(
            flops=n_elems if scale is not None else 0,
            transcendentals=0,
            bytes_accessed=total_bytes,
        ),
    )(image)


class ConvertImageDtype:
    """Mirror of the PyTorch module: returns (converted_image, target)."""

    def __init__(self, dtype=jnp.float32):
        self.dtype = dtype

    def __call__(self, image, target=None):
        return convert_image_dtype(image, self.dtype), target


if __name__ == "__main__":
    key = jax.random.PRNGKey(0)
    k1, k2 = jax.random.split(key)

    # Small NCHW uint8 image, like a torchvision segmentation sample batch.
    x_u8 = jax.random.randint(k1, (2, 4, 16, 16), minval=0, maxval=256,
                              dtype=jnp.int32).astype(jnp.uint8)
    target = {"masks": jnp.zeros((2, 16, 16), dtype=jnp.int32)}
    ref = x_u8.astype(jnp.float32) / 255.0

    # Module path (small input -> fused XLA fast path).
    module = ConvertImageDtype(jnp.float32)
    out, out_target = module(x_u8, target)
    out = jax.block_until_ready(out)
    assert out.shape == x_u8.shape and out.dtype == jnp.float32
    assert jnp.max(jnp.abs(out - ref)) < 1e-6
    assert out_target is target

    # Force the Pallas kernel on the same aligned small image.
    out_p = jax.block_until_ready(
        convert_image_dtype(x_u8, jnp.float32, force_pallas=True))
    assert out_p.shape == x_u8.shape and out_p.dtype == jnp.float32
    assert jnp.max(jnp.abs(out_p - ref)) < 1e-6

    # Force the Pallas kernel on ragged CHW / HW images (last dim not a multiple
    # of 128, H row-tiled with a masked partial boundary block).
    x_r3 = jax.random.randint(k2, (3, 131, 127), minval=0, maxval=256,
                              dtype=jnp.int32).astype(jnp.uint8)
    ref_r3 = x_r3.astype(jnp.float32) / 255.0
    out_r3 = jax.block_until_ready(
        convert_image_dtype(x_r3, jnp.float32, force_pallas=True))
    assert out_r3.shape == x_r3.shape and out_r3.dtype == jnp.float32
    assert jnp.max(jnp.abs(out_r3 - ref_r3)) < 1e-6

    x_r2 = x_r3[0]  # (131, 127) grayscale, 2-D ragged path
    out_r2 = jax.block_until_ready(
        convert_image_dtype(x_r2, jnp.float32, force_pallas=True))
    assert jnp.max(jnp.abs(out_r2 - ref_r3[0])) < 1e-6

    # float -> float cast path (f32 -> bf16) through the Pallas kernel.
    out_bf16 = jax.block_until_ready(
        convert_image_dtype(ref_r3, jnp.bfloat16, force_pallas=True))
    assert out_bf16.dtype == jnp.bfloat16 and out_bf16.shape == ref_r3.shape

    # bool -> float (plain 0/1 cast, XLA path).
    out_b = jax.block_until_ready(convert_image_dtype(x_u8 > 127, jnp.float32))
    assert out_b.dtype == jnp.float32 and out_b.shape == x_u8.shape

    print("KERNEL_OK")
</pallas_src>

<mosaic_0001>
module attributes {stable_mosaic.version = 11 : i64} {
  func.func @kernel(%arg0: i32, %arg1: i32, %arg2: i32, %arg3: i32, %arg4: memref<2x4x16x16xi8, #tpu.memory_space<vmem>>, %arg5: memref<2x4x16x16xf32, #tpu.memory_space<vmem>>) attributes {dimension_semantics = [#tpu.dimension_semantics<parallel>, #tpu.dimension_semantics<parallel>, #tpu.dimension_semantics<parallel>, #tpu.dimension_semantics<parallel>], iteration_bounds = array<i64: 1, 1, 1, 1>, scalar_prefetch = 0 : i64, scratch_operands = 0 : i64, tpu.core_type = #tpu.core_type<tc>, window_params = [{transform_indices = @transform_0, window_bounds = array<i64: 2, 4, 16, 16>}, {transform_indices = @transform_1, window_bounds = array<i64: 2, 4, 16, 16>}]} {
    %c0 = arith.constant 0 : index
    %c0_0 = arith.constant 0 : index
    %c0_1 = arith.constant 0 : index
    %c0_2 = arith.constant 0 : index
    %0 = vector.load %arg4[%c0, %c0_0, %c0_1, %c0_2] : memref<2x4x16x16xi8, #tpu.memory_space<vmem>>, vector<2x4x16x16xi8>
    %1 = arith.uitofp %0 : vector<2x4x16x16xi8> to vector<2x4x16x16xf32>
    %cst = arith.constant 0.00392156886 : f32
    %2 = vector.broadcast %cst : f32 to vector<2x4x16x16xf32>
    %3 = arith.mulf %1, %2 : vector<2x4x16x16xf32>
    %c0_3 = arith.constant 0 : index
    %c0_4 = arith.constant 0 : index
    %c0_5 = arith.constant 0 : index
    %c0_6 = arith.constant 0 : index
    %4 = vector.load %arg5[%c0_3, %c0_4, %c0_5, %c0_6] : memref<2x4x16x16xf32, #tpu.memory_space<vmem>>, vector<2x4x16x16xf32>
    tpu.vector_store %arg5[%c0_3, %c0_4, %c0_5, %c0_6], %3 {strides = array<i32>} : memref<2x4x16x16xf32, #tpu.memory_space<vmem>>, vector<2x4x16x16xf32>,
    return
  }
  func.func @transform_0(%arg0: i32, %arg1: i32, %arg2: i32, %arg3: i32) -> (i32, i32, i32, i32) {
    %c0_i32 = arith.constant 0 : i32
    return %arg0, %arg1, %arg2, %arg3 : i32, i32, i32, i32
  }
  func.func @transform_1(%arg0: i32, %arg1: i32, %arg2: i32, %arg3: i32) -> (i32, i32, i32, i32) {
    %c0_i32 = arith.constant 0 : i32
    return %arg0, %arg1, %arg2, %arg3 : i32, i32, i32, i32
  }
}

</mosaic_0001>

<llo_original>
// kernel: tpu_custom_call.1
$region0: #{tpu_custom_call.1}
  #allocation0 [shape = 'u32[]', space=smem, size = 0x4, offset = 0x4, fixed_abs, tag = 'smem constant byte address 0x4 - core index']
  #allocation1 [shape = 'u32[72,128]{1,0:T(1,128)}', space=vmem, size = 0x9000, scoped, tag = 'internal scratch']
  %s0 = inlined_call_operand.hbm [shape: u8[2,4,16,16], index: 0, kind: input, shape index: {}]
  %s1 = inlined_call_operand.hbm [shape: f32[2,4,16,16], index: 1, kind: output, shape index: {}]
  %s2 = sld [smem:[#allocation0]]
  $region18: #{tpu_custom_call.1} parent=0
    _
  %s4 = ssub.s32 1, %s2
  %s5 = scalar_select 0, %s4, %s2
  $region1: #{tpu_custom_call.1} parent=0
    #allocation2 [shape = 'u8[16384]{0}', space=vmem, size = 0x4000, scoped, tag = 'input window, operand 0, single buffered']
    #allocation3 [shape = 's32[1]{0}', space=sflag, size = 0x4, scoped, tag = 'scoped memory for tpu_custom_call.1']
    #allocation4 [shape = 's32[1]{0}', space=sflag, size = 0x4, scoped, tag = 'scoped memory for tpu_custom_call.1']
    #allocation5 [shape = 'u8[65536]{0}', space=vmem, size = 0x10000, scoped, tag = 'output window, operand 0, single buffered']
    %6 = vsyncpa [#allocation3], 0
    %7 = vsyncpa [#allocation4], 0
    // Predicated region
    $region2: #{tpu_custom_call.1} parent=1 // pred_check
      _
    $region3: #{tpu_custom_call.1} parent=1 // pred_check_branch
      %9 = sbr.rel (0) target = $region5
    $region4: #{tpu_custom_call.1} parent=1 // pred_region
      %11 = vsyncadd [#allocation3], 0
      %s12 = sshll.u32 %s0, 4
      %s13 = int_to_ptr.hbm [resolvable:$true] %s12
      %s14 = sshll.u32 [#allocation2], 4
      %s15 = int_to_ptr.vmem [resolvable:$true] %s14
      %20 = dma.hbm_to_vmem [thread:$0]  %s13, 512, %s15, [#allocation3], 32, 32, 2
    $region5: #{tpu_custom_call.1} parent=1 // pred_fallthru
      _
    // Predicated region
    $region6: #{tpu_custom_call.1} parent=1 // pred_check
      _
    $region7: #{tpu_custom_call.1} parent=1 // pred_check_branch
      %22 = sbr.rel (0) target = $region9
    $region8: #{tpu_custom_call.1} parent=1 // pred_region
      %24 = dma.done [#allocation3], 512
    $region9: #{tpu_custom_call.1} parent=1 // pred_fallthru
      _
    %v25 = vld [vmem:[#allocation2] sm:$0x3]
    %v26 = vld [vmem:[#allocation2 + $0x2] sm:$0x3]
    %v27 = vld [vmem:[#allocation2 + $0x4] sm:$0x3]
    %v28 = vld [vmem:[#allocation2 + $0x6] sm:$0x3]
    %v29 = vld [vmem:[#allocation2 + $0x8] sm:$0x3]
    %v30 = vld [vmem:[#allocation2 + $0xa] sm:$0x3]
    %v31 = vld [vmem:[#allocation2 + $0xc] sm:$0x3]
    %v32 = vld [vmem:[#allocation2 + $0xe] sm:$0x3]
    %v33 = vld [vmem:[#allocation2 + $0x10] sm:$0x3]
    %v34 = vld [vmem:[#allocation2 + $0x12] sm:$0x3]
    %v35 = vld [vmem:[#allocation2 + $0x14] sm:$0x3]
    %v36 = vld [vmem:[#allocation2 + $0x16] sm:$0x3]
    %v37 = vld [vmem:[#allocation2 + $0x18] sm:$0x3]
    %v38 = vld [vmem:[#allocation2 + $0x1a] sm:$0x3]
    %v39 = vld [vmem:[#allocation2 + $0x1c] sm:$0x3]
    %v40 = vld [vmem:[#allocation2 + $0x1e] sm:$0x3]
    %v41 = vunpack.c.0.s8 %v25
    %v42 = vunpack.c.0.s8 %v26
    %v43 = vunpack.c.0.s8 %v27
    %v44 = vunpack.c.0.s8 %v28
    %v45 = vunpack.c.0.s8 %v29
    %v46 = vunpack.c.0.s8 %v30
    %v47 = vunpack.c.0.s8 %v31
    %v48 = vunpack.c.0.s8 %v32
    %v49 = vunpack.c.0.s8 %v33
    %v50 = vunpack.c.0.s8 %v34
    %v51 = vunpack.c.0.s8 %v35
    %v52 = vunpack.c.0.s8 %v36
    %v53 = vunpack.c.0.s8 %v37
    %v54 = vunpack.c.0.s8 %v38
    %v55 = vunpack.c.0.s8 %v39
    %v56 = vunpack.c.0.s8 %v40
    %v57 = vand.u32 %v41, 255
    %v58 = vand.u32 %v42, 255
    %v59 = vand.u32 %v43, 255
    %v60 = vand.u32 %v44, 255
    %v61 = vand.u32 %v45, 255
    %v62 = vand.u32 %v46, 255
    %v63 = vand.u32 %v47, 255
    %v64 = vand.u32 %v48, 255
    %v65 = vand.u32 %v49, 255
    %v66 = vand.u32 %v50, 255
    %v67 = vand.u32 %v51, 255
    %v68 = vand.u32 %v52, 255
    %v69 = vand.u32 %v53, 255
    %v70 = vand.u32 %v54, 255
    %v71 = vand.u32 %v55, 255
    %v72 = vand.u32 %v56, 255
    %v73 = vcvt.s32.f32 %v57
    %v74 = vcvt.s32.f32 %v58
    %v75 = vcvt.s32.f32 %v59
    %v76 = vcvt.s32.f32 %v60
    %v77 = vcvt.s32.f32 %v61
    %v78 = vcvt.s32.f32 %v62
    %v79 = vcvt.s32.f32 %v63
    %v80 = vcvt.s32.f32 %v64
    %v81 = vcvt.s32.f32 %v65
    %v82 = vcvt.s32.f32 %v66
    %v83 = vcvt.s32.f32 %v67
    %v84 = vcvt.s32.f32 %v68
    %v85 = vcvt.s32.f32 %v69
    %v86 = vcvt.s32.f32 %v70
    %v87 = vcvt.s32.f32 %v71
    %v88 = vcvt.s32.f32 %v72
    %v89 = vmul.f32 %v73, 0.003921569
    %v90 = vmul.f32 %v74, 0.003921569
    %v91 = vmul.f32 %v75, 0.003921569
    %v92 = vmul.f32 %v76, 0.003921569
    %v93 = vmul.f32 %v77, 0.003921569
    %v94 = vmul.f32 %v78, 0.003921569
    %v95 = vmul.f32 %v79, 0.003921569
    %v96 = vmul.f32 %v80, 0.003921569
    %v97 = vmul.f32 %v81, 0.003921569
    %v98 = vmul.f32 %v82, 0.003921569
    %v99 = vmul.f32 %v83, 0.003921569
    %v100 = vmul.f32 %v84, 0.003921569
    %v101 = vmul.f32 %v85, 0.003921569
    %v102 = vmul.f32 %v86, 0.003921569
    %v103 = vmul.f32 %v87, 0.003921569
    %v104 = vmul.f32 %v88, 0.003921569
    %vm105 = vcmask 130048
    %106 = vst.msk [vmem:[#allocation5] sm:$0xff] %vm105, %v89
    %107 = vst.msk [vmem:[#allocation5 + $0x8] sm:$0xff] %vm105, %v90
    %108 = vst.msk [vmem:[#allocation5 + $0x10] sm:$0xff] %vm105, %v91
    %109 = vst.msk [vmem:[#allocation5 + $0x18] sm:$0xff] %vm105, %v92
    %110 = vst.msk [vmem:[#allocation5 + $0x20] sm:$0xff] %vm105, %v93
    %111 = vst.msk [vmem:[#allocation5 + $0x28] sm:$0xff] %vm105, %v94
    %112 = vst.msk [vmem:[#allocation5 + $0x30] sm:$0xff] %vm105, %v95
    %113 = vst.msk [vmem:[#allocation5 + $0x38] sm:$0xff] %vm105, %v96
    %114 = vst.msk [vmem:[#allocation5 + $0x40] sm:$0xff] %vm105, %v97
    %115 = vst.msk [vmem:[#allocation5 + $0x48] sm:$0xff] %vm105, %v98
    %116 = vst.msk [vmem:[#allocation5 + $0x50] sm:$0xff] %vm105, %v99
    %117 = vst.msk [vmem:[#allocation5 + $0x58] sm:$0xff] %vm105, %v100
    %118 = vst.msk [vmem:[#allocation5 + $0x60] sm:$0xff] %vm105, %v101
    %119 = vst.msk [vmem:[#allocation5 + $0x68] sm:$0xff] %vm105, %v102
    %120 = vst.msk [vmem:[#allocation5 + $0x70] sm:$0xff] %vm105, %v103
    %121 = vst.msk [vmem:[#allocation5 + $0x78] sm:$0xff] %vm105, %v104
    // Predicated region
    $region10: #{tpu_custom_call.1} parent=1 // pred_check
      _
    $region11: #{tpu_custom_call.1} parent=1 // pred_check_branch
      %123 = sbr.rel (0) target = $region13
    $region12: #{tpu_custom_call.1} parent=1 // pred_region
      %125 = vsyncadd [#allocation4], 0
      %s126 = sshll.u32 [#allocation5], 4
      %s127 = int_to_ptr.vmem [resolvable:$true] %s126
      %s128 = sshll.u32 %s1, 4
      %s129 = int_to_ptr.hbm [resolvable:$true] %s128
      %134 = dma.vmem_to_hbm [thread:$0]  %s127, 2048, %s129, [#allocation4], 128, 128, 8
    $region13: #{tpu_custom_call.1} parent=1 // pred_fallthru
      _
    // Predicated region
    $region14: #{tpu_custom_call.1} parent=1 // pred_check
      _
    $region15: #{tpu_custom_call.1} parent=1 // pred_check_branch
      %136 = sbr.rel (0) target = $region17
    $region16: #{tpu_custom_call.1} parent=1 // pred_region
      %138 = dma.done [#allocation4], 2048
    $region17: #{tpu_custom_call.1} parent=1 // pred_fallthru
      _
    %139 = vsyncpa [#allocation3], 1
    %140 = vsyncpa [#allocation4], 1

</llo_original>
